<compile_context>
chip_gen: v6e
topology: v6e:2x2x1
jax: 0.10.0
libtpu: 0.0.40
codegen_flags: <defaults>
</compile_context>

<pallas_src>
import functools

import jax
import jax.numpy as jnp
from jax.experimental import pallas as pl
from jax.experimental.pallas import tpu as pltpu


def _round_up(x: int, m: int) -> int:
    return ((x + m - 1) // m) * m


def mean_pool_kernel(h_ref, m_ref, o_ref, acc_ref, cnt_ref, *, use_mxu):
    # h_ref  : (TB, TS, TH)            hidden-state tile (storage dtype)
    # m_ref  : (TB, 1, TS) | (TB, TS)  attention-mask tile (storage dtype)
    # o_ref  : (TB, TH)                output tile
    # acc_ref: f32 running masked sum, cnt_ref: (TB, 1) f32 running mask count
    s = pl.program_id(2)

    @pl.when(s == 0)
    def _init():
        acc_ref[...] = jnp.zeros_like(acc_ref)
        cnt_ref[...] = jnp.zeros_like(cnt_ref)

    h = h_ref[...]

    if use_mxu:
        m = m_ref[...]                                   # (TB, 1, TS)
        # Batched (1, TS) @ (TS, TH) contraction on the MXU, f32 accumulation.
        acc_ref[...] += jnp.einsum(
            "bqs,bsh->bqh", m, h, preferred_element_type=jnp.float32
        )                                                # (TB, 1, TH)
        cnt_ref[...] += jnp.sum(m.astype(jnp.float32), axis=2)       # (TB, 1)
    else:
        m = m_ref[...].astype(jnp.float32)               # (TB, TS)
        acc_ref[...] += jnp.sum(
            h.astype(jnp.float32) * m[:, :, None], axis=1
        )                                                # (TB, TH)
        cnt_ref[...] += jnp.sum(m, axis=1, keepdims=True)             # (TB, 1)

    @pl.when(s == pl.num_programs(2) - 1)
    def _finalize():
        denom = jnp.maximum(cnt_ref[...], 1e-8)          # torch.clip(min=1e-8)
        inv = pl.reciprocal(denom, approx=False)         # (TB, 1), exact
        pooled = acc_ref[...]
        if use_mxu:
            pooled = pooled[:, 0, :]                     # (TB, TH)
        o_ref[...] = (pooled * inv).astype(o_ref.dtype)


def mean_pooling(last_hidden_state, attention_mask):
    B, S, H = last_hidden_state.shape
    assert attention_mask.shape == (B, S)
    dtype = last_hidden_state.dtype
    itemsize = jnp.dtype(dtype).itemsize

    # MXU contraction for narrow dtypes (native MXU inputs); exact VPU for f32.
    use_mxu = itemsize < 4

    TB = 8                                   # batch rows per step (dense stores)
    Bp = _round_up(B, TB)

    # Hidden dim: lane-align to 128, tile if large.
    Hp = _round_up(H, 128)
    TH = Hp if Hp <= 2048 else 1024
    Hp = _round_up(Hp, TH)

    # Sequence dim: sublane-aligned chunks sized so a hidden-state block is a
    # few MiB (double-buffered by the Pallas pipeline).
    sub = 8 if itemsize >= 4 else 16
    target_block_bytes = 4 * 1024 * 1024
    max_ts = max(sub, (target_block_bytes // (TB * TH * itemsize)) // sub * sub)
    Sp = _round_up(S, sub)
    if Sp <= max_ts:
        TS = Sp                              # single chunk: full-extent mask lanes
    else:
        TS = max(128, (max_ts // 128) * 128) # keep the mask's lane dim 128-aligned
        Sp = _round_up(S, TS)

    # Zero-pad (padded rows/positions have mask 0 and contribute nothing).
    h = last_hidden_state
    if (Bp, Sp, Hp) != (B, S, H):
        h = jnp.pad(h, ((0, Bp - B), (0, Sp - S), (0, Hp - H)))
    m = attention_mask.astype(dtype)
    if (Bp, Sp) != (B, S):
        m = jnp.pad(m, ((0, Bp - B), (0, Sp - S)))

    if use_mxu:
        m = m[:, None, :]                                       # (Bp, 1, Sp)
        mask_spec = pl.BlockSpec((TB, 1, TS), lambda b, hh, ss: (b, 0, ss))
        acc_shape = pltpu.VMEM((TB, 1, TH), jnp.float32)
    else:
        mask_spec = pl.BlockSpec((TB, TS), lambda b, hh, ss: (b, ss))
        acc_shape = pltpu.VMEM((TB, TH), jnp.float32)

    grid = (Bp // TB, Hp // TH, Sp // TS)

    out = pl.pallas_call(
        functools.partial(mean_pool_kernel, use_mxu=use_mxu),
        out_shape=jax.ShapeDtypeStruct((Bp, Hp), dtype),
        grid_spec=pltpu.PrefetchScalarGridSpec(
            num_scalar_prefetch=0,
            grid=grid,
            in_specs=[
                pl.BlockSpec((TB, TS, TH), lambda b, hh, ss: (b, ss, hh)),
                mask_spec,
            ],
            out_specs=pl.BlockSpec((TB, TH), lambda b, hh, ss: (b, hh)),
            scratch_shapes=[
                acc_shape,                       # f32 masked-sum accumulator
                pltpu.VMEM((TB, 1), jnp.float32),  # f32 mask count
            ],
        ),
        compiler_params=pltpu.CompilerParams(
            dimension_semantics=("parallel", "parallel", "arbitrary"),
            vmem_limit_bytes=64 * 1024 * 1024,
        ),
    )(h, m)

    return out[:B, :H]


def mean_pooling_ref(last_hidden_state, attention_mask):
    # Pure-JAX reference mirroring the PyTorch forward.
    input_mask = attention_mask[:, :, None].astype(last_hidden_state.dtype)
    sentence_embedding = jnp.sum(input_mask * last_hidden_state, axis=1)
    sum_mask = jnp.clip(jnp.sum(input_mask, axis=1), 1e-8, None)
    return sentence_embedding / sum_mask


if __name__ == "__main__":
    key = jax.random.PRNGKey(0)
    k1, k2 = jax.random.split(key)

    B, S, H = 2, 8, 32
    last_hidden_state = jax.random.normal(k1, (B, S, H), dtype=jnp.float32)
    # 0/1 attention mask (float, as it multiplies the hidden states).
    attention_mask = (jax.random.uniform(k2, (B, S)) > 0.3).astype(jnp.float32)

    out = mean_pooling(last_hidden_state, attention_mask)
    out = jax.block_until_ready(out)

    ref = mean_pooling_ref(last_hidden_state, attention_mask)
    assert out.shape == (B, H)
    assert jnp.allclose(out, ref, atol=1e-5, rtol=1e-5)

    print("KERNEL_OK")
</pallas_src>

<mosaic_0001>
module attributes {stable_mosaic.version = 11 : i64} {
  func.func @mean_pool_kernel(%arg0: i32, %arg1: i32, %arg2: i32, %arg3: memref<8x8x128xf32, #tpu.memory_space<vmem>>, %arg4: memref<8x8xf32, #tpu.memory_space<vmem>>, %arg5: memref<8x128xf32, #tpu.memory_space<vmem>>, %arg6: memref<8x128xf32, #tpu.memory_space<vmem>>, %arg7: memref<8x1xf32, #tpu.memory_space<vmem>>) attributes {dimension_semantics = [#tpu.dimension_semantics<parallel>, #tpu.dimension_semantics<parallel>, #tpu.dimension_semantics<arbitrary>], iteration_bounds = array<i64: 1, 1, 1>, scalar_prefetch = 0 : i64, scratch_operands = 2 : i64, tpu.core_type = #tpu.core_type<tc>, window_params = [{transform_indices = @transform_0, window_bounds = array<i64: 8, 8, 128>}, {transform_indices = @transform_1, window_bounds = array<i64: 8, 8>}, {transform_indices = @transform_2, window_bounds = array<i64: 8, 128>}]} {
    %c0_i32 = arith.constant 0 : i32
    %0 = arith.cmpi eq, %arg2, %c0_i32 : i32
    %1 = arith.extui %0 : i1 to i32
    %c0_i32_0 = arith.constant 0 : i32
    %2 = arith.cmpi ne, %1, %c0_i32_0 : i32
    scf.if %2 {
      %cst_16 = arith.constant 0.000000e+00 : f32
      %20 = vector.broadcast %cst_16 : f32 to vector<8x128xf32>
      %c0_17 = arith.constant 0 : index
      %c0_18 = arith.constant 0 : index
      %21 = vector.load %arg6[%c0_17, %c0_18] : memref<8x128xf32, #tpu.memory_space<vmem>>, vector<8x128xf32>
      tpu.vector_store %arg6[%c0_17, %c0_18], %20 {strides = array<i32>} : memref<8x128xf32, #tpu.memory_space<vmem>>, vector<8x128xf32>,
      %cst_19 = arith.constant 0.000000e+00 : f32
      %22 = vector.broadcast %cst_19 : f32 to vector<8x1xf32>
      %c0_20 = arith.constant 0 : index
      %c0_21 = arith.constant 0 : index
      %23 = vector.load %arg7[%c0_20, %c0_21] : memref<8x1xf32, #tpu.memory_space<vmem>>, vector<8x1xf32>
      tpu.vector_store %arg7[%c0_20, %c0_21], %22 {strides = array<i32>} : memref<8x1xf32, #tpu.memory_space<vmem>>, vector<8x1xf32>,
    } else {
    }
    %c0 = arith.constant 0 : index
    %c0_1 = arith.constant 0 : index
    %c0_2 = arith.constant 0 : index
    %3 = vector.load %arg3[%c0, %c0_1, %c0_2] : memref<8x8x128xf32, #tpu.memory_space<vmem>>, vector<8x8x128xf32>
    %c0_3 = arith.constant 0 : index
    %c0_4 = arith.constant 0 : index
    %4 = vector.load %arg4[%c0_3, %c0_4] : memref<8x8xf32, #tpu.memory_space<vmem>>, vector<8x8xf32>
    %c0_5 = arith.constant 0 : index
    %c0_6 = arith.constant 0 : index
    %5 = vector.load %arg6[%c0_5, %c0_6] : memref<8x128xf32, #tpu.memory_space<vmem>>, vector<8x128xf32>
    %6 = vector.shape_cast %4 : vector<8x8xf32> to vector<8x8x1xf32>
    %7 = vector.broadcast %6 : vector<8x8x1xf32> to vector<8x8x128xf32>
    %8 = arith.mulf %3, %7 : vector<8x8x128xf32>
    %cst = arith.constant dense<0.000000e+00> : vector<8x128xf32>
    %9 = vector.multi_reduction <add>, %8, %cst [1] : vector<8x8x128xf32> to vector<8x128xf32>
    %10 = arith.addf %5, %9 : vector<8x128xf32>
    %c0_7 = arith.constant 0 : index
    %c0_8 = arith.constant 0 : index
    %11 = vector.load %arg6[%c0_7, %c0_8] : memref<8x128xf32, #tpu.memory_space<vmem>>, vector<8x128xf32>
    tpu.vector_store %arg6[%c0_7, %c0_8], %10 {strides = array<i32>} : memref<8x128xf32, #tpu.memory_space<vmem>>, vector<8x128xf32>,
    %c0_9 = arith.constant 0 : index
    %c0_10 = arith.constant 0 : index
    %12 = vector.load %arg7[%c0_9, %c0_10] : memref<8x1xf32, #tpu.memory_space<vmem>>, vector<8x1xf32>
    %cst_11 = arith.constant dense<0.000000e+00> : vector<8xf32>
    %13 = vector.multi_reduction <add>, %4, %cst_11 [1] : vector<8x8xf32> to vector<8xf32>
    %14 = vector.shape_cast %13 : vector<8xf32> to vector<8x1xf32>
    %15 = arith.addf %12, %14 : vector<8x1xf32>
    %c0_12 = arith.constant 0 : index
    %c0_13 = arith.constant 0 : index
    %16 = vector.load %arg7[%c0_12, %c0_13] : memref<8x1xf32, #tpu.memory_space<vmem>>, vector<8x1xf32>
    tpu.vector_store %arg7[%c0_12, %c0_13], %15 {strides = array<i32>} : memref<8x1xf32, #tpu.memory_space<vmem>>, vector<8x1xf32>,
    %c0_i32_14 = arith.constant 0 : i32
    %17 = arith.cmpi eq, %arg2, %c0_i32_14 : i32
    %18 = arith.extui %17 : i1 to i32
    %c0_i32_15 = arith.constant 0 : i32
    %19 = arith.cmpi ne, %18, %c0_i32_15 : i32
    scf.if %19 {
      %c0_16 = arith.constant 0 : index
      %c0_17 = arith.constant 0 : index
      %20 = vector.load %arg7[%c0_16, %c0_17] : memref<8x1xf32, #tpu.memory_space<vmem>>, vector<8x1xf32>
      %cst_18 = arith.constant 9.99999993E-9 : f32
      %21 = vector.broadcast %cst_18 : f32 to vector<8x1xf32>
      %22 = arith.maximumf %20, %21 : vector<8x1xf32>
      %23 = tpu.reciprocal %22 : vector<8x1xf32> -> vector<8x1xf32>
      %c0_19 = arith.constant 0 : index
      %c0_20 = arith.constant 0 : index
      %24 = vector.load %arg6[%c0_19, %c0_20] : memref<8x128xf32, #tpu.memory_space<vmem>>, vector<8x128xf32>
      %25 = vector.broadcast %23 : vector<8x1xf32> to vector<8x128xf32>
      %26 = arith.mulf %24, %25 : vector<8x128xf32>
      %c0_21 = arith.constant 0 : index
      %c0_22 = arith.constant 0 : index
      %27 = vector.load %arg5[%c0_21, %c0_22] : memref<8x128xf32, #tpu.memory_space<vmem>>, vector<8x128xf32>
      tpu.vector_store %arg5[%c0_21, %c0_22], %26 {strides = array<i32>} : memref<8x128xf32, #tpu.memory_space<vmem>>, vector<8x128xf32>,
    } else {
    }
    return
  }
  func.func @transform_0(%arg0: i32, %arg1: i32, %arg2: i32) -> (i32, i32, i32) {
    %c0_i32 = arith.constant 0 : i32
    return %arg0, %arg2, %arg1 : i32, i32, i32
  }
  func.func @transform_1(%arg0: i32, %arg1: i32, %arg2: i32) -> (i32, i32) {
    %c0_i32 = arith.constant 0 : i32
    return %arg0, %arg2 : i32, i32
  }
  func.func @transform_2(%arg0: i32, %arg1: i32, %arg2: i32) -> (i32, i32) {
    %c0_i32 = arith.constant 0 : i32
    return %arg0, %arg1 : i32, i32
  }
}

</mosaic_0001>

<llo_original>
// kernel: tpu_custom_call.1
$region0: #{tpu_custom_call.1}
  #allocation0 [shape = 'u32[]', space=smem, size = 0x4, offset = 0x4, fixed_abs, tag = 'smem constant byte address 0x4 - core index']
  #allocation1 [shape = 'u32[144,128]{1,0:T(1,128)}', space=vmem, size = 0x12000, scoped, tag = 'internal scratch']
  #allocation2 [shape = 'f32[8,128]{1,0:T(8,128)}', space=vmem, size = 0x1000, scoped, tag = 'scratch operand']
  #allocation3 [shape = 'f32[8,1]{1,0:T(8,128)}', space=vmem, size = 0x1000, scoped, tag = 'scratch operand']
  %s0 = inlined_call_operand.hbm [shape: f32[8,8,128], index: 0, kind: input, shape index: {}]
  %s1 = inlined_call_operand.hbm [shape: f32[8,8], index: 1, kind: input, shape index: {}]
  %s2 = inlined_call_operand.hbm [shape: f32[8,128], index: 2, kind: output, shape index: {}]
  %s3 = sld [smem:[#allocation0]]
  $region34: #{tpu_custom_call.1} parent=0
    _
  %s5 = ssub.s32 1, %s3
  %s6 = scalar_select 0, %s5, %s3
  $region1: #{tpu_custom_call.1} parent=0
    #allocation4 [shape = 'u8[32768]{0}', space=vmem, size = 0x8000, scoped, tag = 'input window, operand 0, single buffered']
    #allocation5 [shape = 's32[1]{0}', space=sflag, size = 0x4, scoped, tag = 'scoped memory for tpu_custom_call.1']
    #allocation6 [shape = 's32[1]{0}', space=sflag, size = 0x4, scoped, tag = 'scoped memory for tpu_custom_call.1']
    #allocation7 [shape = 'u8[4096]{0}', space=vmem, size = 0x1000, scoped, tag = 'input window, operand 1, single buffered']
    #allocation8 [shape = 's32[1]{0}', space=sflag, size = 0x4, scoped, tag = 'scoped memory for tpu_custom_call.1']
    #allocation9 [shape = 'u8[4096]{0}', space=vmem, size = 0x1000, scoped, tag = 'output window, operand 0, single buffered']
    %7 = vsyncpa [#allocation5], 0
    %8 = vsyncpa [#allocation8], 0
    %9 = vsyncpa [#allocation6], 0
    // Predicated region
    $region2: #{tpu_custom_call.1} parent=1 // pred_check
      _
    $region3: #{tpu_custom_call.1} parent=1 // pred_check_branch
      %11 = sbr.rel (0) target = $region5
    $region4: #{tpu_custom_call.1} parent=1 // pred_region
      %s13 = ssub.s32 1024, 1024
      %14 = vsyncadd [#allocation5], %s13
      %s15 = sshll.u32 [#allocation4], 4
      %s16 = int_to_ptr.vmem [resolvable:$true] %s15
      %21 = dma.hbm_to_vmem [thread:$0]  %s0, 1024, %s16, [#allocation5], 128, 128, 8
    $region5: #{tpu_custom_call.1} parent=1 // pred_fallthru
      _
    // Predicated region
    $region6: #{tpu_custom_call.1} parent=1 // pred_check
      _
    $region7: #{tpu_custom_call.1} parent=1 // pred_check_branch
      %23 = sbr.rel (0) target = $region9
    $region8: #{tpu_custom_call.1} parent=1 // pred_region
      %s25 = ssub.s32 128, 128
      %26 = vsyncadd [#allocation8], %s25
      %s28 = sshll.u32 [#allocation7], 4
      %s29 = int_to_ptr.vmem [resolvable:$true] %s28
      %31 = dma.hbm_to_vmem [thread:$0]  %s1, 128, %s29, [#allocation8]
    $region9: #{tpu_custom_call.1} parent=1 // pred_fallthru
      _
    // Predicated region
    $region10: #{tpu_custom_call.1} parent=1 // pred_check
      _
    $region11: #{tpu_custom_call.1} parent=1 // pred_check_branch
      %33 = sbr.rel (0) target = $region13
    $region12: #{tpu_custom_call.1} parent=1 // pred_region
      %34 = dma.done [#allocation5], 1024
    $region13: #{tpu_custom_call.1} parent=1 // pred_fallthru
      _
    // Predicated region
    $region14: #{tpu_custom_call.1} parent=1 // pred_check
      _
    $region15: #{tpu_custom_call.1} parent=1 // pred_check_branch
      %36 = sbr.rel (0) target = $region17
    $region16: #{tpu_custom_call.1} parent=1 // pred_region
      %37 = dma.done [#allocation8], 128
    $region17: #{tpu_custom_call.1} parent=1 // pred_fallthru
      _
    %p38 = scmp.eq.s32.totalorder 0, 0
    // Predicated region
    $region18: #{tpu_custom_call.1} parent=1 // pred_check
      %p39 = pneg %p38
    $region19: #{tpu_custom_call.1} parent=1 // pred_check_branch
      %41 = sbr.rel (%p39) target = $region21
    $region20: #{tpu_custom_call.1} parent=1 // pred_region
      %42 = vst [vmem:[#allocation2] sm:$0xff] 0.0
      %vm43 = vcmask 7168
      %44 = vst.msk [vmem:[#allocation3] sm:$0xff] %vm43, 0.0
    $region21: #{tpu_custom_call.1} parent=1 // pred_fallthru
      _
    %v45 = vld [vmem:[#allocation4] sm:$0xff]
    %v46 = vld [vmem:[#allocation4 + $0x8] sm:$0xff]
    %v47 = vld [vmem:[#allocation4 + $0x10] sm:$0xff]
    %v48 = vld [vmem:[#allocation4 + $0x18] sm:$0xff]
    %v49 = vld [vmem:[#allocation4 + $0x20] sm:$0xff]
    %v50 = vld [vmem:[#allocation4 + $0x28] sm:$0xff]
    %v51 = vld [vmem:[#allocation4 + $0x30] sm:$0xff]
    %v52 = vld [vmem:[#allocation4 + $0x38] sm:$0xff]
    %v53 = vld [vmem:[#allocation7] sm:$0xff]
    %v54 = vld [vmem:[#allocation2] sm:$0xff]
    %v55 = vlaneseq
    %v56 = vshrl.u32 %v55, 7
    %v57 = vsub.s32 0, %v56
    %v58 = vrot.slane %v53, %v57
    %60 = vbcast.lane.b32.xlu0 %v58, 256
    %v61 = vpop.permute.xlu0 %60
    %v62 = vlaneseq
    %v63 = vshrl.u32 %v62, 7
    %v64 = vsub.s32 1, %v63
    %v65 = vrot.slane %v53, %v64
    %67 = vbcast.lane.b32.xlu0 %v65, 256
    %v68 = vpop.permute.xlu0 %67
    %v69 = vlaneseq
    %v70 = vshrl.u32 %v69, 7
    %v71 = vsub.s32 2, %v70
    %v72 = vrot.slane %v53, %v71
    %74 = vbcast.lane.b32.xlu0 %v72, 256
    %v75 = vpop.permute.xlu0 %74
    %v76 = vlaneseq
    %v77 = vshrl.u32 %v76, 7
    %v78 = vsub.s32 3, %v77
    %v79 = vrot.slane %v53, %v78
    %81 = vbcast.lane.b32.xlu0 %v79, 256
    %v82 = vpop.permute.xlu0 %81
    %v83 = vlaneseq
    %v84 = vshrl.u32 %v83, 7
    %v85 = vsub.s32 4, %v84
    %v86 = vrot.slane %v53, %v85
    %88 = vbcast.lane.b32.xlu0 %v86, 256
    %v89 = vpop.permute.xlu0 %88
    %v90 = vlaneseq
    %v91 = vshrl.u32 %v90, 7
    %v92 = vsub.s32 5, %v91
    %v93 = vrot.slane %v53, %v92
    %95 = vbcast.lane.b32.xlu0 %v93, 256
    %v96 = vpop.permute.xlu0 %95
    %v97 = vlaneseq
    %v98 = vshrl.u32 %v97, 7
    %v99 = vsub.s32 6, %v98
    %v100 = vrot.slane %v53, %v99
    %102 = vbcast.lane.b32.xlu0 %v100, 256
    %v103 = vpop.permute.xlu0 %102
    %v104 = vlaneseq
    %v105 = vshrl.u32 %v104, 7
    %v106 = vsub.s32 7, %v105
    %v107 = vrot.slane %v53, %v106
    %109 = vbcast.lane.b32.xlu0 %v107, 256
    %v110 = vpop.permute.xlu0 %109
    %v111 = vmul.f32 %v45, %v61
    %v112 = vmul.f32 %v46, %v68
    %v113 = vmul.f32 %v47, %v75
    %v114 = vmul.f32 %v48, %v82
    %v115 = vmul.f32 %v49, %v89
    %v116 = vmul.f32 %v50, %v96
    %v117 = vmul.f32 %v51, %v103
    %v118 = vmul.f32 %v52, %v110
    %v119 = vrot.slane %v111, 4
    %v120 = vadd.f32 %v111, %v119
    %v121 = vrot.slane %v120, 2
    %v122 = vadd.f32 %v120, %v121
    %v123 = vrot.slane %v122, 1
    %v124 = vadd.f32 %v122, %v123
    %v125 = vrot.slane %v112, 4
    %v126 = vadd.f32 %v112, %v125
    %v127 = vrot.slane %v126, 2
    %v128 = vadd.f32 %v126, %v127
    %v129 = vrot.slane %v128, 1
    %v130 = vadd.f32 %v128, %v129
    %v131 = vrot.slane %v113, 4
    %v132 = vadd.f32 %v113, %v131
    %v133 = vrot.slane %v132, 2
    %v134 = vadd.f32 %v132, %v133
    %v135 = vrot.slane %v134, 1
    %v136 = vadd.f32 %v134, %v135
    %v137 = vrot.slane %v114, 4
    %v138 = vadd.f32 %v114, %v137
    %v139 = vrot.slane %v138, 2
    %v140 = vadd.f32 %v138, %v139
    %v141 = vrot.slane %v140, 1
    %v142 = vadd.f32 %v140, %v141
    %v143 = vrot.slane %v115, 4
    %v144 = vadd.f32 %v115, %v143
    %v145 = vrot.slane %v144, 2
    %v146 = vadd.f32 %v144, %v145
    %v147 = vrot.slane %v146, 1
    %v148 = vadd.f32 %v146, %v147
    %v149 = vrot.slane %v116, 4
    %v150 = vadd.f32 %v116, %v149
    %v151 = vrot.slane %v150, 2
    %v152 = vadd.f32 %v150, %v151
    %v153 = vrot.slane %v152, 1
    %v154 = vadd.f32 %v152, %v153
    %v155 = vrot.slane %v117, 4
    %v156 = vadd.f32 %v117, %v155
    %v157 = vrot.slane %v156, 2
    %v158 = vadd.f32 %v156, %v157
    %v159 = vrot.slane %v158, 1
    %v160 = vadd.f32 %v158, %v159
    %v161 = vrot.slane %v118, 4
    %v162 = vadd.f32 %v118, %v161
    %v163 = vrot.slane %v162, 2
    %v164 = vadd.f32 %v162, %v163
    %v165 = vrot.slane %v164, 1
    %v166 = vadd.f32 %v164, %v165
    %vm175 = vcmask 1041409
    %v176 = vsel %vm175, %v130, %v124
    %vm177 = vcmask 1042434
    %v178 = vsel %vm177, %v136, %v176
    %vm179 = vcmask 1043459
    %v180 = vsel %vm179, %v142, %v178
    %vm181 = vcmask 1044484
    %v182 = vsel %vm181, %v148, %v180
    %vm183 = vcmask 1045509
    %v184 = vsel %vm183, %v154, %v182
    %vm185 = vcmask 1046534
    %v186 = vsel %vm185, %v160, %v184
    %vm187 = vcmask 1047559
    %v188 = vsel %vm187, %v166, %v186
    %v190 = vadd.f32 %v54, %v188
    %191 = vst [vmem:[#allocation2] sm:$0xff] %v190
    %v192 = vld [vmem:[#allocation3] sm:$0xff]
    %vm193 = vcmask 64512
    %v194 = vsel %vm193, %v53, 0.0
    %195 = vadd.xlane.f32.xlu0 %v194
    %v196 = vpop.xlane.xlu0 %195
    %v197 = vadd.f32 %v192, %v196
    %vm198 = vcmask 7168
    %199 = vst.msk [vmem:[#allocation3] sm:$0xff] %vm198, %v197
    // Predicated region
    $region22: #{tpu_custom_call.1} parent=1 // pred_check
      %p200 = pneg %p38
    $region23: #{tpu_custom_call.1} parent=1 // pred_check_branch
      %202 = sbr.rel (%p200) target = $region25
    $region24: #{tpu_custom_call.1} parent=1 // pred_region
      %v203 = vld [vmem:[#allocation3] sm:$0xff]
      %v204 = vmax.f32 %v203, 1e-08
      %v205 = vrcp.pop %v204
      %v206 = vld [vmem:[#allocation2] sm:$0xff]
      %208 = vset.pattern.permute.xlu0 0
      %209 = vperm.xlu0 %208, %v205
      %v210 = vpop.permute.xlu0 %209
      %v212 = vmul.f32 %v206, %v210
      %213 = vst [vmem:[#allocation9] sm:$0xff] %v212
    $region25: #{tpu_custom_call.1} parent=1 // pred_fallthru
      _
    // Predicated region
    $region26: #{tpu_custom_call.1} parent=1 // pred_check
      _
    $region27: #{tpu_custom_call.1} parent=1 // pred_check_branch
      %215 = sbr.rel (0) target = $region29
    $region28: #{tpu_custom_call.1} parent=1 // pred_region
      %s217 = ssub.s32 128, 128
      %218 = vsyncadd [#allocation6], %s217
      %s220 = sshll.u32 [#allocation9], 4
      %s221 = int_to_ptr.vmem [resolvable:$true] %s220
      %223 = dma.vmem_to_hbm [thread:$0]  %s221, 128, %s2, [#allocation6]
    $region29: #{tpu_custom_call.1} parent=1 // pred_fallthru
      _
    // Predicated region
    $region30: #{tpu_custom_call.1} parent=1 // pred_check
      _
    $region31: #{tpu_custom_call.1} parent=1 // pred_check_branch
      %225 = sbr.rel (0) target = $region33
    $region32: #{tpu_custom_call.1} parent=1 // pred_region
      %226 = dma.done [#allocation6], 128
    $region33: #{tpu_custom_call.1} parent=1 // pred_fallthru
      _
    %227 = vsyncpa [#allocation5], 1
    %228 = vsyncpa [#allocation8], 1
    %229 = vsyncpa [#allocation6], 1

</llo_original>
